<compile_context>
chip_gen: v7x
topology: tpu7x:2x2x1
jax: 0.10.0
libtpu: 0.0.40
codegen_flags: <defaults>
</compile_context>

<pallas_src>
import jax
import jax.numpy as jnp
from jax.experimental import pallas as pl
from jax.experimental.pallas import tpu as pltpu


def _round_up(x: int, m: int) -> int:
    return (x + m - 1) // m * m


def _sketchy_embed_kernel(xc_ref, xr_ref, wc_ref, wr_ref, out_ref):
    # xc_ref : (tm, 1)  int32 content ids in [0, Vc)
    # xr_ref : (tm, 1)  int32 role ids    in [0, Vr)
    # wc_ref : (Vcp, Dc) content table (rows padded to a 128 multiple with zeros)
    # wr_ref : (Vrp, Dr) struct table  (rows padded to a 128 multiple with zeros)
    # out_ref: (tm, Dc + Dr) concatenated embedding tile (no lane padding)
    xc = xc_ref[...]
    xr = xr_ref[...]
    tm = xc.shape[0]
    vc = wc_ref.shape[0]
    vr = wr_ref.shape[0]

    # One-hot selectors; 0/1 are exact in the table dtype, K dims are 128-aligned.
    lane_c = jax.lax.broadcasted_iota(jnp.int32, (tm, vc), 1)
    lane_r = jax.lax.broadcasted_iota(jnp.int32, (tm, vr), 1)
    sel_c = (lane_c == xc).astype(wc_ref.dtype)
    sel_r = (lane_r == xr).astype(wr_ref.dtype)

    # Two MXU lookups, f32 accumulation, lane-concat in-register, single full-tile store.
    emb_c = jnp.dot(sel_c, wc_ref[...], preferred_element_type=jnp.float32)
    emb_r = jnp.dot(sel_r, wr_ref[...], preferred_element_type=jnp.float32)
    out_ref[...] = jnp.concatenate([emb_c, emb_r], axis=-1).astype(out_ref.dtype)


def sketchy_embedder(x, x_role, w_content, w_struct, *, tm=1024,
                     table_dtype=jnp.bfloat16, xla_fallback_below=1024):
    """x, x_role: (B, S) int ids.  Returns (ret (B, S, Dc+Dr), mask (B, S) bool)."""
    B, S = x.shape
    Vc, Dc = w_content.shape
    Vr, Dr = w_struct.shape
    D = Dc + Dr
    N = B * S

    mask = x != 0
    wc = w_content.astype(table_dtype)
    wr = w_struct.astype(table_dtype)

    # Small-N fast path: a 1-2 step Pallas grid is pure launch overhead; fused XLA
    # gathers win on every generation below ~1-2K tokens.
    if N < xla_fallback_below:
        ret = jnp.concatenate(
            [wc[x].astype(w_content.dtype), wr[x_role].astype(w_content.dtype)],
            axis=-1)
        return ret, mask

    # Token tile: large by default (amortize ~0.35 us/step), shrunk to a multiple of 8
    # for small inputs, and capped so the grid has >= 2 steps when possible so the
    # "parallel" token axis can shard across v7x's two TensorCores.
    tm_eff = min(tm, _round_up(N, 8))
    if N > 8:
        tm_eff = min(tm_eff, _round_up((N + 1) // 2, 8))
    Np = _round_up(N, tm_eff)            # rows, padded to a whole number of tiles

    # 128-align the vocab (K) dims: unmasked selector build and unmasked MXU K feed.
    Vcp = _round_up(Vc, 128)
    Vrp = _round_up(Vr, 128)
    wc = jnp.pad(wc, ((0, Vcp - Vc), (0, 0)))   # padded rows are zeros, never selected
    wr = jnp.pad(wr, ((0, Vrp - Vr), (0, 0)))

    # Flatten + pad ids (padded rows compute garbage and are dropped; usually Np == N).
    xc = jnp.pad(x.reshape(N).astype(jnp.int32), (0, Np - N)).reshape(Np, 1)
    xr = jnp.pad(x_role.reshape(N).astype(jnp.int32), (0, Np - N)).reshape(Np, 1)

    out = pl.pallas_call(
        _sketchy_embed_kernel,
        out_shape=jax.ShapeDtypeStruct((Np, D), w_content.dtype),
        grid_spec=pltpu.PrefetchScalarGridSpec(
            num_scalar_prefetch=0,
            grid=(Np // tm_eff,),
            in_specs=[
                pl.BlockSpec((tm_eff, 1), lambda i: (i, 0)),   # content ids tile
                pl.BlockSpec((tm_eff, 1), lambda i: (i, 0)),   # role ids tile
                # Constant index_maps: tables are DMA'd into VMEM once and reused
                # across all grid steps (no re-fetch on unchanged block index).
                pl.BlockSpec((Vcp, Dc), lambda i: (0, 0)),
                pl.BlockSpec((Vrp, Dr), lambda i: (0, 0)),
            ],
            # Lane dim == full array width D: no padded columns, no wrapper slice.
            out_specs=pl.BlockSpec((tm_eff, D), lambda i: (i, 0)),
        ),
        compiler_params=pltpu.CompilerParams(
            dimension_semantics=("parallel",),       # token tiles shard across TCs
            vmem_limit_bytes=32 * 1024 * 1024,
        ),
    )(xc, xr, wc, wr)

    ret = out if Np == N else out[:N]    # row slice only, and only when padding exists
    ret = ret.reshape(B, S, D)
    return ret, mask


def _reference(x, x_role, w_content, w_struct, table_dtype):
    """Pure-JAX reference at the kernel's table precision, plus f32 reference and mask."""
    wc_q = w_content.astype(table_dtype).astype(jnp.float32)
    wr_q = w_struct.astype(table_dtype).astype(jnp.float32)
    ref_q = jnp.concatenate([wc_q[x], wr_q[x_role]], axis=-1)
    ref_f32 = jnp.concatenate([w_content[x], w_struct[x_role]], axis=-1)
    return ref_q, ref_f32, x != 0


if __name__ == "__main__":
    key = jax.random.PRNGKey(0)

    # ---- Case 1: tiny shapes (forces the Pallas path; grid of 2 x 8-row tiles) ----
    B, S = 2, 8
    Vc, Dc = 128, 32
    Vr, Dr = 8, 32
    k1, k2, k3, k4, key = jax.random.split(key, 5)
    w_content = jax.random.normal(k1, (Vc, Dc), dtype=jnp.float32)
    w_content = w_content.at[0].set(0.0)       # padding row (padding_idx=0 convention)
    w_struct = jax.random.normal(k2, (Vr, Dr), dtype=jnp.float32)
    x = jax.random.randint(k3, (B, S), 0, Vc, dtype=jnp.int32)
    x = x.at[0, -2:].set(0)                    # some padding tokens -> non-trivial mask
    x_role = jax.random.randint(k4, (B, S), 0, Vr, dtype=jnp.int32)

    ret, mask = sketchy_embedder(x, x_role, w_content, w_struct,
                                 xla_fallback_below=0)   # force the kernel path
    ret = jax.block_until_ready(ret)
    mask = jax.block_until_ready(mask)

    ref_q, ref_f32, ref_mask = _reference(x, x_role, w_content, w_struct, jnp.bfloat16)
    assert ret.shape == (B, S, Dc + Dr)
    assert mask.shape == (B, S)
    assert jnp.allclose(ret, ref_q, atol=1e-6, rtol=1e-6)        # exact at bf16 table prec
    assert jnp.allclose(ret, ref_f32, atol=5e-2, rtol=5e-2)      # loose vs f32 tables
    assert bool(jnp.all(mask == ref_mask))

    # ---- Case 2: larger shapes (multi-step grid, tm=1024 tiles, default threshold) ----
    B2, S2 = 4, 1024
    Vc2, Dc2 = 512, 32
    Vr2, Dr2 = 8, 32
    k1, k2, k3, k4, key = jax.random.split(key, 5)
    w_content2 = jax.random.normal(k1, (Vc2, Dc2), dtype=jnp.float32)
    w_content2 = w_content2.at[0].set(0.0)
    w_struct2 = jax.random.normal(k2, (Vr2, Dr2), dtype=jnp.float32)
    x2 = jax.random.randint(k3, (B2, S2), 0, Vc2, dtype=jnp.int32)
    x2 = x2.at[:, -3:].set(0)
    x_role2 = jax.random.randint(k4, (B2, S2), 0, Vr2, dtype=jnp.int32)

    ret2, mask2 = sketchy_embedder(x2, x_role2, w_content2, w_struct2)
    ret2 = jax.block_until_ready(ret2)
    mask2 = jax.block_until_ready(mask2)

    ref_q2, ref_f32_2, ref_mask2 = _reference(x2, x_role2, w_content2, w_struct2,
                                              jnp.bfloat16)
    assert ret2.shape == (B2, S2, Dc2 + Dr2)
    assert jnp.allclose(ret2, ref_q2, atol=1e-6, rtol=1e-6)
    assert jnp.allclose(ret2, ref_f32_2, atol=5e-2, rtol=5e-2)
    assert bool(jnp.all(mask2 == ref_mask2))

    print("KERNEL_OK")
</pallas_src>

<mosaic_0001>
module attributes {stable_mosaic.version = 11 : i64} {
  func.func @_sketchy_embed_kernel(%arg0: i32, %arg1: memref<8x1xi32, #tpu.memory_space<vmem>>, %arg2: memref<8x1xi32, #tpu.memory_space<vmem>>, %arg3: memref<128x32xbf16, #tpu.memory_space<vmem>>, %arg4: memref<128x32xbf16, #tpu.memory_space<vmem>>, %arg5: memref<8x64xf32, #tpu.memory_space<vmem>>) attributes {dimension_semantics = [#tpu.dimension_semantics<parallel>], iteration_bounds = array<i64: 2>, scalar_prefetch = 0 : i64, scratch_operands = 0 : i64, tpu.core_type = #tpu.core_type<tc>, window_params = [{transform_indices = @transform_0, window_bounds = array<i64: 8, 1>}, {transform_indices = @transform_1, window_bounds = array<i64: 8, 1>}, {pipeline_mode = #tpu.pipeline_mode<synchronous>, transform_indices = @transform_2, window_bounds = array<i64: 128, 32>}, {pipeline_mode = #tpu.pipeline_mode<synchronous>, transform_indices = @transform_3, window_bounds = array<i64: 128, 32>}, {transform_indices = @transform_4, window_bounds = array<i64: 8, 64>}]} {
    %c0 = arith.constant 0 : index
    %c0_0 = arith.constant 0 : index
    %0 = vector.load %arg1[%c0, %c0_0] : memref<8x1xi32, #tpu.memory_space<vmem>>, vector<8x1xi32>
    %c0_1 = arith.constant 0 : index
    %c0_2 = arith.constant 0 : index
    %1 = vector.load %arg2[%c0_1, %c0_2] : memref<8x1xi32, #tpu.memory_space<vmem>>, vector<8x1xi32>
    %2 = tpu.iota {dimensions = array<i32: 1>} : vector<8x128xi32>
    %3 = tpu.iota {dimensions = array<i32: 1>} : vector<8x128xi32>
    %4 = vector.broadcast %0 : vector<8x1xi32> to vector<8x128xi32>
    %5 = arith.cmpi eq, %2, %4 : vector<8x128xi32>
    %6 = arith.extui %5 : vector<8x128xi1> to vector<8x128xi32>
    %7 = arith.sitofp %6 : vector<8x128xi32> to vector<8x128xf32>
    %8 = arith.truncf %7 : vector<8x128xf32> to vector<8x128xbf16>
    %9 = vector.broadcast %1 : vector<8x1xi32> to vector<8x128xi32>
    %10 = arith.cmpi eq, %3, %9 : vector<8x128xi32>
    %11 = arith.extui %10 : vector<8x128xi1> to vector<8x128xi32>
    %12 = arith.sitofp %11 : vector<8x128xi32> to vector<8x128xf32>
    %13 = arith.truncf %12 : vector<8x128xf32> to vector<8x128xbf16>
    %c0_3 = arith.constant 0 : index
    %c0_4 = arith.constant 0 : index
    %14 = vector.load %arg3[%c0_3, %c0_4] : memref<128x32xbf16, #tpu.memory_space<vmem>>, vector<128x32xbf16>
    %cst = arith.constant dense<0.000000e+00> : vector<8x32xf32>
    %15 = tpu.matmul %8, %14, %cst {dimension_numbers = #tpu.dot_dimension_numbers<[1], [0], [0], [1], [0, 0, 1, 1], [], []>} : vector<8x128xbf16>, vector<128x32xbf16>, vector<8x32xf32> -> vector<8x32xf32>
    %c0_5 = arith.constant 0 : index
    %c0_6 = arith.constant 0 : index
    %16 = vector.load %arg4[%c0_5, %c0_6] : memref<128x32xbf16, #tpu.memory_space<vmem>>, vector<128x32xbf16>
    %cst_7 = arith.constant dense<0.000000e+00> : vector<8x32xf32>
    %17 = tpu.matmul %13, %16, %cst_7 {dimension_numbers = #tpu.dot_dimension_numbers<[1], [0], [0], [1], [0, 0, 1, 1], [], []>} : vector<8x128xbf16>, vector<128x32xbf16>, vector<8x32xf32> -> vector<8x32xf32>
    %18 = tpu.concatenate %15, %17 in 1 : vector<8x32xf32>, vector<8x32xf32> -> vector<8x64xf32>
    %c0_8 = arith.constant 0 : index
    %c0_9 = arith.constant 0 : index
    %19 = vector.load %arg5[%c0_8, %c0_9] : memref<8x64xf32, #tpu.memory_space<vmem>>, vector<8x64xf32>
    tpu.vector_store %arg5[%c0_8, %c0_9], %18 {strides = array<i32>} : memref<8x64xf32, #tpu.memory_space<vmem>>, vector<8x64xf32>,
    return
  }
  func.func @transform_0(%arg0: i32) -> (i32, i32) {
    %c0_i32 = arith.constant 0 : i32
    %c0_i32_0 = arith.constant 0 : i32
    return %arg0, %c0_i32 : i32, i32
  }
  func.func @transform_1(%arg0: i32) -> (i32, i32) {
    %c0_i32 = arith.constant 0 : i32
    %c0_i32_0 = arith.constant 0 : i32
    return %arg0, %c0_i32 : i32, i32
  }
  func.func @transform_2(%arg0: i32) -> (i32, i32) {
    %c0_i32 = arith.constant 0 : i32
    %c0_i32_0 = arith.constant 0 : i32
    %c0_i32_1 = arith.constant 0 : i32
    return %c0_i32, %c0_i32_0 : i32, i32
  }
  func.func @transform_3(%arg0: i32) -> (i32, i32) {
    %c0_i32 = arith.constant 0 : i32
    %c0_i32_0 = arith.constant 0 : i32
    %c0_i32_1 = arith.constant 0 : i32
    return %c0_i32, %c0_i32_0 : i32, i32
  }
  func.func @transform_4(%arg0: i32) -> (i32, i32) {
    %c0_i32 = arith.constant 0 : i32
    %c0_i32_0 = arith.constant 0 : i32
    return %arg0, %c0_i32 : i32, i32
  }
}

</mosaic_0001>

<llo_original>
// kernel: tpu_custom_call.1
$region0: #{tpu_custom_call.1}
  #allocation0 [shape = 'u32[]', space=smem, size = 0x4, offset = 0x4, fixed_abs, tag = 'smem constant byte address 0x4 - core index']
  #allocation1 [shape = 'u32[144,128]{1,0:T(1,128)}', space=vmem, size = 0x12000, scoped, tag = 'internal scratch']
  %s0 = inlined_call_operand.vmem [shape: s32[16,1], index: 0, kind: input, shape index: {}]
  %s1 = inlined_call_operand.vmem [shape: s32[16,1], index: 1, kind: input, shape index: {}]
  %s2 = inlined_call_operand.vmem [shape: bf16[128,32], index: 2, kind: input, shape index: {}]
  %s3 = inlined_call_operand.vmem [shape: bf16[128,32], index: 3, kind: input, shape index: {}]
  %s4 = inlined_call_operand.hbm [shape: f32[16,64], index: 4, kind: output, shape index: {}]
  %s5 = sld [smem:[#allocation0]]
  $region49: #{tpu_custom_call.1} parent=0
    _
  %s7 = ssub.s32 1, %s5
  %s8 = scalar_select 0, %s7, %s5
  $region1: #{tpu_custom_call.1} parent=0
    #allocation2 [shape = 'u8[8192]{0}', space=vmem, size = 0x2000, scoped, tag = 'output window, operand 0']
    #allocation3 [shape = 's32[2]{0}', space=sflag, size = 0x8, scoped, tag = 'scoped memory for tpu_custom_call.1']
    %9 = vsyncpa [#allocation3], 0
    %s10 = scalar_lea.sflag [#allocation3], 1
    %11 = vsyncpa %s10, 0
    loop: start=0, step=1, limit=4
    $region2: #{tpu_custom_call.1} parent=1 // loop_pre_header
      _
    $region3: #{tpu_custom_call.1} parent=1 // loop_header
      %s13 = sphi 0, %s17
      %p14 = scmp.ge.s32.totalorder %s13, 4
      %s23 = sphi 0, %s25
      %s26 = sphi 0, %s23
      %s27 = sphi 0, %s26
      %s43 = sphi 0, %s27
      %s49 = sphi 0, %s51
      %s52 = sphi 0, %s49
      %s53 = sphi 0, %s52
      %s69 = sphi 0, %s53
      %s73 = sphi 0, %s73
      %s75 = sphi 0, %s73
      %s76 = sphi 0, %s75
      %s90 = sphi 0, %s76
      %s94 = sphi 0, %s94
      %s96 = sphi 0, %s94
      %s97 = sphi 0, %s96
      %s111 = sphi 0, %s97
      %s117 = sphi 0, %s119
      %s120 = sphi 0, %s117
      %s121 = sphi 0, %s120
      %s137 = sphi 0, %s121
    $region4: #{tpu_custom_call.1} parent=1 // loop_header_branch
      %16 = sbr.rel (%p14) target = $region8
    $region5: #{tpu_custom_call.1} parent=1 // loop_body
      %s18 = ssub.s32 %s13, 1
      %s19 = ssub.s32 %s13, 2
      %s20 = sadd.s32 %s13, 1
      %s21 = ssub.s32 %s13, %s20
      %p22 = scmp.eq.s32.totalorder %s21, 0
      %s24 = sadd.s32 %s23, 1
      %s25 = scalar_select %p22, %s23, %s24
      %p28 = pneg %p22
      %p29 = scmp.eq.s32.totalorder %s13, 1
      %p30 = por %p28, %p29
      %p31 = scmp.ne.s32.totalorder %s23, %s26
      %p32 = scmp.eq.s32.totalorder %s13, 0
      %p33 = por %p31, %p32
      %p34 = scmp.ne.s32.totalorder %s23, %s26
      %p35 = scmp.eq.s32.totalorder %s18, 1
      %p36 = por %p34, %p35
      %p37 = scmp.ne.s32.totalorder %s26, %s27
      %p38 = scmp.eq.s32.totalorder %s18, 0
      %p39 = por %p37, %p38
      %p40 = scmp.ne.s32.totalorder %s26, %s27
      %p41 = scmp.eq.s32.totalorder %s19, 1
      %p42 = por %p40, %p41
      %p44 = scmp.ne.s32.totalorder %s27, %s43
      %p45 = scmp.eq.s32.totalorder %s19, 0
      %p46 = por %p44, %p45
      %s47 = ssub.s32 %s13, %s20
      %p48 = scmp.eq.s32.totalorder %s47, 0
      %s50 = sadd.s32 %s49, 1
      %s51 = scalar_select %p48, %s49, %s50
      %p54 = pneg %p48
      %p55 = scmp.eq.s32.totalorder %s13, 1
      %p56 = por %p54, %p55
      %p57 = scmp.ne.s32.totalorder %s49, %s52
      %p58 = scmp.eq.s32.totalorder %s13, 0
      %p59 = por %p57, %p58
      %p60 = scmp.ne.s32.totalorder %s49, %s52
      %p61 = scmp.eq.s32.totalorder %s18, 1
      %p62 = por %p60, %p61
      %p63 = scmp.ne.s32.totalorder %s52, %s53
      %p64 = scmp.eq.s32.totalorder %s18, 0
      %p65 = por %p63, %p64
      %p66 = scmp.ne.s32.totalorder %s52, %s53
      %p67 = scmp.eq.s32.totalorder %s19, 1
      %p68 = por %p66, %p67
      %p70 = scmp.ne.s32.totalorder %s53, %s69
      %p71 = scmp.eq.s32.totalorder %s19, 0
      %p72 = por %p70, %p71
      %s74 = sadd.s32 %s73, 1
      %p77 = scmp.eq.s32.totalorder %s13, 1
      %p78 = scmp.ne.s32.totalorder %s73, %s75
      %p79 = scmp.eq.s32.totalorder %s13, 0
      %p80 = por %p78, %p79
      %p81 = scmp.ne.s32.totalorder %s73, %s75
      %p82 = scmp.eq.s32.totalorder %s18, 1
      %p83 = por %p81, %p82
      %p84 = scmp.ne.s32.totalorder %s75, %s76
      %p85 = scmp.eq.s32.totalorder %s18, 0
      %p86 = por %p84, %p85
      %p87 = scmp.ne.s32.totalorder %s75, %s76
      %p88 = scmp.eq.s32.totalorder %s19, 1
      %p89 = por %p87, %p88
      %p91 = scmp.ne.s32.totalorder %s76, %s90
      %p92 = scmp.eq.s32.totalorder %s19, 0
      %p93 = por %p91, %p92
      %s95 = sadd.s32 %s94, 1
      %p98 = scmp.eq.s32.totalorder %s13, 1
      %p99 = scmp.ne.s32.totalorder %s94, %s96
      %p100 = scmp.eq.s32.totalorder %s13, 0
      %p101 = por %p99, %p100
      %p102 = scmp.ne.s32.totalorder %s94, %s96
      %p103 = scmp.eq.s32.totalorder %s18, 1
      %p104 = por %p102, %p103
      %p105 = scmp.ne.s32.totalorder %s96, %s97
      %p106 = scmp.eq.s32.totalorder %s18, 0
      %p107 = por %p105, %p106
      %p108 = scmp.ne.s32.totalorder %s96, %s97
      %p109 = scmp.eq.s32.totalorder %s19, 1
      %p110 = por %p108, %p109
      %p112 = scmp.ne.s32.totalorder %s97, %s111
      %p113 = scmp.eq.s32.totalorder %s19, 0
      %p114 = por %p112, %p113
      %s115 = ssub.s32 %s13, %s20
      %p116 = scmp.eq.s32.totalorder %s115, 0
      %s118 = sadd.s32 %s117, 1
      %s119 = scalar_select %p116, %s117, %s118
      %p122 = pneg %p116
      %p123 = scmp.eq.s32.totalorder %s13, 1
      %p124 = por %p122, %p123
      %p125 = scmp.ne.s32.totalorder %s117, %s120
      %p126 = scmp.eq.s32.totalorder %s13, 0
      %p127 = por %p125, %p126
      %p128 = scmp.ne.s32.totalorder %s117, %s120
      %p129 = scmp.eq.s32.totalorder %s18, 1
      %p130 = por %p128, %p129
      %p131 = scmp.ne.s32.totalorder %s120, %s121
      %p132 = scmp.eq.s32.totalorder %s18, 0
      %p133 = por %p131, %p132
      %p134 = scmp.ne.s32.totalorder %s120, %s121
      %p135 = scmp.eq.s32.totalorder %s19, 1
      %p136 = por %p134, %p135
      %p138 = scmp.ne.s32.totalorder %s121, %s137
      %p139 = scmp.eq.s32.totalorder %s19, 0
      %p140 = por %p138, %p139
      %p141 = scmp.le.s32.totalorder 1, %s13
      %p142 = scmp.lt.s32.totalorder %s13, 3
      %p143 = pnand %p141, %p142
      %p144 = pneg %p143
      // Predicated region
      $region9: #{tpu_custom_call.1} parent=5 // pred_check
        _
      $region10: #{tpu_custom_call.1} parent=5 // pred_check_branch
        %146 = sbr.rel (%p143) target = $region12
      $region11: #{tpu_custom_call.1} parent=5 // pred_region
        %s147 = ssub.s32 %s13, 1
        // Predicated region
        $region13: #{tpu_custom_call.1} parent=11 // pred_check
          %p148 = pneg %p86
        $region14: #{tpu_custom_call.1} parent=11 // pred_check_branch
          %150 = sbr.rel (%p148) target = $region16
        $region15: #{tpu_custom_call.1} parent=11 // pred_region
          _
        $region16: #{tpu_custom_call.1} parent=11 // pred_fallthru
          _
        // Predicated region
        $region17: #{tpu_custom_call.1} parent=11 // pred_check
          %p151 = pneg %p107
        $region18: #{tpu_custom_call.1} parent=11 // pred_check_branch
          %153 = sbr.rel (%p151) target = $region20
        $region19: #{tpu_custom_call.1} parent=11 // pred_region
          _
        $region20: #{tpu_custom_call.1} parent=11 // pred_fallthru
          _
      $region12: #{tpu_custom_call.1} parent=5 // pred_fallthru
        _
      %p154 = scmp.lt.s32.totalorder %s13, 2
      // Predicated region
      $region21: #{tpu_custom_call.1} parent=5 // pred_check
        %p155 = pneg %p154
      $region22: #{tpu_custom_call.1} parent=5 // pred_check_branch
        %157 = sbr.rel (%p155) target = $region24
      $region23: #{tpu_custom_call.1} parent=5 // pred_region
        // Predicated region
        $region25: #{tpu_custom_call.1} parent=23 // pred_check
          %p158 = pneg %p33
        $region26: #{tpu_custom_call.1} parent=23 // pred_check_branch
          %160 = sbr.rel (%p158) target = $region28
        $region27: #{tpu_custom_call.1} parent=23 // pred_region
          %p161 = scmp.lt.s32.totalorder %s13, 1
          %s162 = scalar_select %p161, %s13, 1
          %s163 = smul.addr %s162, 8
          %s164 = scalar_lea.vmem %s0, %s163
        $region28: #{tpu_custom_call.1} parent=23 // pred_fallthru
          _
        // Predicated region
        $region29: #{tpu_custom_call.1} parent=23 // pred_check
          %p165 = pneg %p59
        $region30: #{tpu_custom_call.1} parent=23 // pred_check_branch
          %167 = sbr.rel (%p165) target = $region32
        $region31: #{tpu_custom_call.1} parent=23 // pred_region
          %p168 = scmp.lt.s32.totalorder %s13, 1
          %s169 = scalar_select %p168, %s13, 1
          %s170 = smul.addr %s169, 8
          %s171 = scalar_lea.vmem %s1, %s170
        $region32: #{tpu_custom_call.1} parent=23 // pred_fallthru
          _
      $region24: #{tpu_custom_call.1} parent=5 // pred_fallthru
        _
      %p172 = scmp.le.s32.totalorder 1, %s13
      %p173 = scmp.lt.s32.totalorder %s13, 3
      %p174 = pnand %p172, %p173
      %p175 = pneg %p174
      // Predicated region
      $region33: #{tpu_custom_call.1} parent=5 // pred_check
        _
      $region34: #{tpu_custom_call.1} parent=5 // pred_check_branch
        %177 = sbr.rel (%p174) target = $region36
      $region35: #{tpu_custom_call.1} parent=5 // pred_region
        %s178 = ssub.s32 %s13, 1
        %p179 = scmp.lt.s32.totalorder %s18, 1
        %s180 = scalar_select %p179, %s18, 1
        %s181 = smul.addr %s180, 8
        %s182 = scalar_lea.vmem %s0, %s181
        %p183 = pneg %p39
        %p184 = pneg %p36
        %p185 = scmp.lt.s32.totalorder %s18, 1
        %s186 = scalar_select %p185, %s18, 1
        %s187 = smul.addr %s186, 8
        %s188 = scalar_lea.vmem %s1, %s187
        %p189 = pneg %p65
        %p190 = pneg %p62
        %p191 = pneg %p86
        %p192 = pneg %p83
        %p193 = pneg %p107
        %p194 = pneg %p104
        %p195 = pneg %p133
        %p196 = pneg %p130
        %s197 = sand.u32 %s120, 1
        %s198 = scalar_lea.sflag [#allocation3], %s197
        %s199 = sand.u32 %s120, 1
        %s200 = smul.addr %s199, 8
        %s201 = scalar_lea.vmem [#allocation2], %s200
        %p202 = scmp.lt.s32.totalorder %s18, 1
        %s203 = scalar_select %p202, %s18, 1
        %s204 = smul.addr %s203, 8
        %s205 = scalar_lea.vmem %s0, %s204
        %p206 = scmp.lt.s32.totalorder %s18, 1
        %s207 = scalar_select %p206, %s18, 1
        %s208 = smul.addr %s207, 8
        %s209 = scalar_lea.vmem %s1, %s208
        %v211 = vld [vmem:[%s205] sm:$0xff]
        %v212 = vld [vmem:[%s209] sm:$0xff]
        %v213 = vlaneseq
        %v214 = vand.u32 %v213, 127
        %215 = vset.pattern.permute.xlu0 0
        %216 = vperm.xlu0 %215, %v211
        %v217 = vpop.permute.xlu0 %216
        %vm218 = vcmp.eq.s32.totalorder %v214, %v217
        %v219 = vsel %vm218, 1, 0
        %v220 = vcvt.s32.f32 %v219
        %v221 = vpack.c.bf16 %v220, %v220
        %222 = vset.pattern.permute.xlu0 0
        %223 = vperm.xlu0 %222, %v212
        %v224 = vpop.permute.xlu0 %223
        %vm225 = vcmp.eq.s32.totalorder %v214, %v224
        %v226 = vsel %vm225, 1, 0
        %v227 = vcvt.s32.f32 %v226
        %v228 = vpack.c.bf16 %v227, %v227
        %v229 = vld [vmem:[%s2] sm:$0xf]
        %v230 = vld [vmem:[%s2 + $0x4] sm:$0xf]
        %v231 = vld [vmem:[%s2 + $0x8] sm:$0xf]
        %v232 = vld [vmem:[%s2 + $0xc] sm:$0xf]
        %v233 = vld [vmem:[%s2 + $0x10] sm:$0xf]
        %v234 = vld [vmem:[%s2 + $0x14] sm:$0xf]
        %v235 = vld [vmem:[%s2 + $0x18] sm:$0xf]
        %v236 = vld [vmem:[%s2 + $0x1c] sm:$0xf]
        %v237 = vld [vmem:[%s2 + $0x20] sm:$0xf]
        %v238 = vld [vmem:[%s2 + $0x24] sm:$0xf]
        %v239 = vld [vmem:[%s2 + $0x28] sm:$0xf]
        %v240 = vld [vmem:[%s2 + $0x2c] sm:$0xf]
        %v241 = vld [vmem:[%s2 + $0x30] sm:$0xf]
        %v242 = vld [vmem:[%s2 + $0x34] sm:$0xf]
        %v243 = vld [vmem:[%s2 + $0x38] sm:$0xf]
        %v244 = vld [vmem:[%s2 + $0x3c] sm:$0xf]
        %v261 = vunpack.c.l.b16 %v229
        %v262 = vunpack.c.l.b16 %v230
        %v263 = vunpack.c.l.b16 %v231
        %v264 = vunpack.c.l.b16 %v232
        %v265 = vunpack.c.l.b16 %v233
        %v266 = vunpack.c.l.b16 %v234
        %v267 = vunpack.c.l.b16 %v235
        %v268 = vunpack.c.l.b16 %v236
        %v269 = vunpack.c.l.b16 %v237
        %v270 = vunpack.c.l.b16 %v238
        %v271 = vunpack.c.l.b16 %v239
        %v272 = vunpack.c.l.b16 %v240
        %v273 = vunpack.c.l.b16 %v241
        %v274 = vunpack.c.l.b16 %v242
        %v275 = vunpack.c.l.b16 %v243
        %v276 = vunpack.c.l.b16 %v244
        %v277 = vpack.c.b16 %v262, %v261
        %v278 = vpack.c.b16 %v264, %v263
        %v279 = vpack.c.b16 %v266, %v265
        %v280 = vpack.c.b16 %v268, %v267
        %v281 = vpack.c.b16 %v270, %v269
        %v282 = vpack.c.b16 %v272, %v271
        %v283 = vpack.c.b16 %v274, %v273
        %v284 = vpack.c.b16 %v276, %v275
        %293 = vmatprep.subr.bf16.mxu0 0
        %294 = vmatpush1.bf16.msra.mxu0 %v277
        %295 = vmatprep.subr.bf16.mxu0 0
        %296 = vmatpush1.bf16.msra.mxu0 %v278
        %297 = vmatprep.subr.bf16.mxu0 0
        %298 = vmatpush1.bf16.msra.mxu0 %v279
        %299 = vmatprep.subr.bf16.mxu0 0
        %300 = vmatpush1.bf16.msra.mxu0 %v280
        %301 = vmatprep.subr.bf16.mxu0 0
        %302 = vmatpush1.bf16.msra.mxu0 %v281
        %303 = vmatprep.subr.bf16.mxu0 0
        %304 = vmatpush1.bf16.msra.mxu0 %v282
        %305 = vmatprep.subr.bf16.mxu0 0
        %306 = vmatpush1.bf16.msra.mxu0 %v283
        %307 = vmatprep.subr.bf16.mxu0 0
        %308 = vmatpush1.bf16.msra.mxu0 %v284
        %309 = vmatprep.subr.bf16.mxu0 0
        %310 = vmatpush1.bf16.msra.mxu0 0
        %311 = vmatprep.subr.bf16.mxu0 0
        %312 = vmatpush1.bf16.msra.mxu0 0
        %313 = vmatprep.subr.bf16.mxu0 0
        %314 = vmatpush1.bf16.msra.mxu0 0
        %315 = vmatprep.subr.bf16.mxu0 0
        %316 = vmatpush1.bf16.msra.mxu0 0
        %317 = vmatprep.subr.bf16.mxu0 0
        %318 = vmatpush1.bf16.msra.mxu0 0
        %319 = vmatprep.subr.bf16.mxu0 0
        %320 = vmatpush1.bf16.msra.mxu0 0
        %321 = vmatprep.subr.bf16.mxu0 0
        %322 = vmatpush1.bf16.msra.mxu0 0
        %323 = vmatprep.subr.bf16.mxu0 0
        %324 = vmatpush1.bf16.msra.mxu0 0
        %325 = vmatprep.mubr.bf16.mxu0 0
        %326 = vmatmul.mubr.bf16.gmra.mrb[0].mxu0 %v221
        %v327 = vpop.f32.mrb[0].mxu0
        %v328 = vadd.f32 0.0, %v327
        %v329 = vpop.f32.mrb[0].mxu0
        %v330 = vpop.f32.mrb[0].mxu0
        %v331 = vpop.f32.mrb[0].mxu0
        %332 = vdwg.mxu0
        %v333 = vld [vmem:[%s3] sm:$0xf]
        %v334 = vld [vmem:[%s3 + $0x4] sm:$0xf]
        %v335 = vld [vmem:[%s3 + $0x8] sm:$0xf]
        %v336 = vld [vmem:[%s3 + $0xc] sm:$0xf]
        %v337 = vld [vmem:[%s3 + $0x10] sm:$0xf]
        %v338 = vld [vmem:[%s3 + $0x14] sm:$0xf]
        %v339 = vld [vmem:[%s3 + $0x18] sm:$0xf]
        %v340 = vld [vmem:[%s3 + $0x1c] sm:$0xf]
        %v341 = vld [vmem:[%s3 + $0x20] sm:$0xf]
        %v342 = vld [vmem:[%s3 + $0x24] sm:$0xf]
        %v343 = vld [vmem:[%s3 + $0x28] sm:$0xf]
        %v344 = vld [vmem:[%s3 + $0x2c] sm:$0xf]
        %v345 = vld [vmem:[%s3 + $0x30] sm:$0xf]
        %v346 = vld [vmem:[%s3 + $0x34] sm:$0xf]
        %v347 = vld [vmem:[%s3 + $0x38] sm:$0xf]
        %v348 = vld [vmem:[%s3 + $0x3c] sm:$0xf]
        %v365 = vunpack.c.l.b16 %v333
        %v366 = vunpack.c.l.b16 %v334
        %v367 = vunpack.c.l.b16 %v335
        %v368 = vunpack.c.l.b16 %v336
        %v369 = vunpack.c.l.b16 %v337
        %v370 = vunpack.c.l.b16 %v338
        %v371 = vunpack.c.l.b16 %v339
        %v372 = vunpack.c.l.b16 %v340
        %v373 = vunpack.c.l.b16 %v341
        %v374 = vunpack.c.l.b16 %v342
        %v375 = vunpack.c.l.b16 %v343
        %v376 = vunpack.c.l.b16 %v344
        %v377 = vunpack.c.l.b16 %v345
        %v378 = vunpack.c.l.b16 %v346
        %v379 = vunpack.c.l.b16 %v347
        %v380 = vunpack.c.l.b16 %v348
        %v381 = vpack.c.b16 %v366, %v365
        %v382 = vpack.c.b16 %v368, %v367
        %v383 = vpack.c.b16 %v370, %v369
        %v384 = vpack.c.b16 %v372, %v371
        %v385 = vpack.c.b16 %v374, %v373
        %v386 = vpack.c.b16 %v376, %v375
        %v387 = vpack.c.b16 %v378, %v377
        %v388 = vpack.c.b16 %v380, %v379
        %397 = vmatprep.subr.bf16.mxu0 0
        %398 = vmatpush1.bf16.msra.mxu0 %v381
        %399 = vmatprep.subr.bf16.mxu0 0
        %400 = vmatpush1.bf16.msra.mxu0 %v382
        %401 = vmatprep.subr.bf16.mxu0 0
        %402 = vmatpush1.bf16.msra.mxu0 %v383
        %403 = vmatprep.subr.bf16.mxu0 0
        %404 = vmatpush1.bf16.msra.mxu0 %v384
        %405 = vmatprep.subr.bf16.mxu0 0
        %406 = vmatpush1.bf16.msra.mxu0 %v385
        %407 = vmatprep.subr.bf16.mxu0 0
        %408 = vmatpush1.bf16.msra.mxu0 %v386
        %409 = vmatprep.subr.bf16.mxu0 0
        %410 = vmatpush1.bf16.msra.mxu0 %v387
        %411 = vmatprep.subr.bf16.mxu0 0
        %412 = vmatpush1.bf16.msra.mxu0 %v388
        %413 = vmatprep.subr.bf16.mxu0 0
        %414 = vmatpush1.bf16.msra.mxu0 0
        %415 = vmatprep.subr.bf16.mxu0 0
        %416 = vmatpush1.bf16.msra.mxu0 0
        %417 = vmatprep.subr.bf16.mxu0 0
        %418 = vmatpush1.bf16.msra.mxu0 0
        %419 = vmatprep.subr.bf16.mxu0 0
        %420 = vmatpush1.bf16.msra.mxu0 0
        %421 = vmatprep.subr.bf16.mxu0 0
        %422 = vmatpush1.bf16.msra.mxu0 0
        %423 = vmatprep.subr.bf16.mxu0 0
        %424 = vmatpush1.bf16.msra.mxu0 0
        %425 = vmatprep.subr.bf16.mxu0 0
        %426 = vmatpush1.bf16.msra.mxu0 0
        %427 = vmatprep.subr.bf16.mxu0 0
        %428 = vmatpush1.bf16.msra.mxu0 0
        %429 = vmatprep.mubr.bf16.mxu0 0
        %430 = vmatmul.mubr.bf16.gmra.mrb[0].mxu0 %v228
        %v431 = vpop.f32.mrb[0].mxu0
        %v432 = vadd.f32 0.0, %v431
        %v433 = vpop.f32.mrb[0].mxu0
        %v434 = vpop.f32.mrb[0].mxu0
        %v435 = vpop.f32.mrb[0].mxu0
        %436 = vdwg.mxu0
        %438 = vrot.lane.b32.xlu0 %v432, 32
        %v439 = vpop.permute.xlu0 %438
        %vm441 = vcmask 261120
        %v442 = vsel %vm441, %v328, %v439
        %vm443 = vcmask 523264
        %444 = vst.msk [vmem:[%s201] sm:$0xff] %vm443, %v442
        %s445 = sand.u32 %s120, 1
        %s446 = scalar_lea.sflag [#allocation3], %s445
        %s447 = sand.u32 %s120, 1
        %s448 = smul.addr %s447, 8
        %s449 = scalar_lea.vmem [#allocation2], %s448
        // Predicated region
        $region37: #{tpu_custom_call.1} parent=35 // pred_check
          %p450 = pneg %p130
        $region38: #{tpu_custom_call.1} parent=35 // pred_check_branch
          %452 = sbr.rel (%p450) target = $region40
        $region39: #{tpu_custom_call.1} parent=35 // pred_region
          %s454 = ssub.s32 128, 128
          %455 = vsyncadd %s446, %s454
          %s456 = smul.addr %s18, 128
          %s457 = scalar_lea.hbm %s4, %s456
          %s459 = sshll.u32 %s449, 4
          %s460 = int_to_ptr.vmem [resolvable:$true] %s459
          %462 = dma.vmem_to_hbm [thread:$0]  %s460, 128, %s457, %s446
        $region40: #{tpu_custom_call.1} parent=35 // pred_fallthru
          _
      $region36: #{tpu_custom_call.1} parent=5 // pred_fallthru
        _
      %p463 = scmp.le.s32.totalorder 2, %s13
      // Predicated region
      $region41: #{tpu_custom_call.1} parent=5 // pred_check
        %p464 = pneg %p463
      $region42: #{tpu_custom_call.1} parent=5 // pred_check_branch
        %466 = sbr.rel (%p464) target = $region44
      $region43: #{tpu_custom_call.1} parent=5 // pred_region
        %s467 = ssub.s32 %s13, 2
        // Predicated region
        $region45: #{tpu_custom_call.1} parent=43 // pred_check
          %p468 = pneg %p136
        $region46: #{tpu_custom_call.1} parent=43 // pred_check_branch
          %470 = sbr.rel (%p468) target = $region48
        $region47: #{tpu_custom_call.1} parent=43 // pred_region
          %s471 = sand.u32 %s121, 1
          %s472 = scalar_lea.sflag [#allocation3], %s471
          %s473 = sand.u32 %s121, 1
          %s474 = smul.addr %s473, 8
          %s475 = scalar_lea.vmem [#allocation2], %s474
          %476 = dma.done %s472, 128
        $region48: #{tpu_custom_call.1} parent=43 // pred_fallthru
          _
      $region44: #{tpu_custom_call.1} parent=5 // pred_fallthru
        _
    $region6: #{tpu_custom_call.1} parent=1 // loop_footer
      %s17 = sadd.s32 1, %s13
    $region7: #{tpu_custom_call.1} parent=1 // loop_footer_branch
      %12 = sbr.rel target = $region3
    $region8: #{tpu_custom_call.1} parent=1 // loop_exit
      _
    %477 = vsyncpa [#allocation3], 1
    %s478 = scalar_lea.sflag [#allocation3], 1
    %479 = vsyncpa %s478, 1

</llo_original>
